<compile_context>
chip_gen: v6e
topology: v6e:2x2x1
jax: 0.10.0
libtpu: 0.0.40
codegen_flags: <defaults>
</compile_context>

<pallas_src>
import jax
import jax.numpy as jnp
from jax.experimental import pallas as pl
from jax.experimental.pallas import tpu as pltpu

NUM_STATES = 2
NUM_ACTIONS = 8
LAYER_SIZES = [NUM_STATES, 50, 100, 80, 30, NUM_ACTIONS]
NUM_LAYERS = len(LAYER_SIZES) - 1          # 5
PAD = 128                                  # lane width / MXU tile


def _mlp_kernel(x_ref, w_ref, b_ref, o_ref):
    # x_ref: (TB, 2) f32            streamed batch tile
    # w_ref: (5, 128, 128) bf16     zero-padded (in, out) weights, VMEM-resident
    # b_ref: (5, 128) f32           zero-padded biases, VMEM-resident
    # o_ref: (TB, NUM_ACTIONS) f32  thin output block
    x = x_ref[...]                                     # (TB, 2) f32

    # --- fc1 (K=2): VPU broadcast-FMA; skip the fill/drain of a K=2 MXU pass.
    #     Only the first two weight rows are nonzero.
    w1 = w_ref[0].astype(jnp.float32)                  # (128, 128)
    h = (x[:, 0:1] * w1[0:1, :]
         + x[:, 1:2] * w1[1:2, :]
         + b_ref[0:1, :])                              # (TB, 128) f32
    h = jnp.maximum(h, 0.0)

    # --- fc2..fc4: (TB,128)@(128,128) MXU matmuls, bf16 inputs / f32 accumulate,
    #     then f32 bias add + ReLU. Zero-padded lanes stay exactly zero.
    for i in (1, 2, 3):
        h = (jnp.dot(h.astype(jnp.bfloat16), w_ref[i],
                     preferred_element_type=jnp.float32)
             + b_ref[i:i + 1, :])
        h = jnp.maximum(h, 0.0)

    # --- output layer: no activation. Compute the full 128-lane MXU result,
    #     then store only the real NUM_ACTIONS logits (masked, thin store).
    logits = (jnp.dot(h.astype(jnp.bfloat16), w_ref[4],
                      preferred_element_type=jnp.float32)
              + b_ref[4:5, :])                         # (TB, 128) f32
    o_ref[...] = logits[:, :NUM_ACTIONS].astype(o_ref.dtype)


def pack_params(params):
    """Pack per-layer (W:(in,out) f32, b:(1,out) f32) into zero-padded slabs:
       W -> (NUM_LAYERS, 128, 128) bf16 (MXU-native), b -> (NUM_LAYERS, 128) f32."""
    w_packed = jnp.zeros((NUM_LAYERS, PAD, PAD), dtype=jnp.bfloat16)
    b_packed = jnp.zeros((NUM_LAYERS, PAD), dtype=jnp.float32)
    for i, (w, b) in enumerate(params):
        fi, fo = w.shape
        w_packed = w_packed.at[i, :fi, :fo].set(w.astype(jnp.bfloat16))
        b_packed = b_packed.at[i, :fo].set(b.reshape(-1))
    return w_packed, b_packed


def _round_up(v, m):
    return -(-v // m) * m


def _pick_tb(B):
    """Batch tile size.
       - Small batches (<=256): one 8-sublane-aligned tile.
       - Large batches: multiple of 256, up to 2048, but capped at ~half the
         padded batch so the grid keeps >= 2 steps (lets the "parallel" axis
         shard across v7x's 2 TensorCores)."""
    if B <= 256:
        return max(8, _round_up(B, 8))
    half = _round_up(_round_up(B, 256) // 2, 256)
    return min(2048, half)


def net_forward(x, w_packed, b_packed):
    """x: (B, NUM_STATES) f32. Returns (B, NUM_ACTIONS) f32."""
    B = x.shape[0]
    TB = _pick_tb(B)
    B_pad = _round_up(B, TB)
    if B_pad != B:
        x = jnp.pad(x, ((0, B_pad - B), (0, 0)))

    grid = (B_pad // TB,)

    # Padded (actual MXU/VPU) work and real HBM traffic, for XLA's scheduler.
    flops = 2 * B_pad * (NUM_STATES * PAD + (NUM_LAYERS - 1) * PAD * PAD)
    bytes_accessed = (B_pad * NUM_STATES * 4            # input rows
                      + B_pad * NUM_ACTIONS * 4         # thin output
                      + int(w_packed.size) * 2          # bf16 weights
                      + int(b_packed.size) * 4)         # f32 biases

    out = pl.pallas_call(
        _mlp_kernel,
        out_shape=jax.ShapeDtypeStruct((B_pad, NUM_ACTIONS), jnp.float32),
        grid=grid,
        in_specs=[
            pl.BlockSpec((TB, NUM_STATES), lambda i: (i, 0)),            # streamed batch
            pl.BlockSpec((NUM_LAYERS, PAD, PAD), lambda i: (0, 0, 0)),   # weight-stationary
            pl.BlockSpec((NUM_LAYERS, PAD), lambda i: (0, 0)),           # bias-stationary
        ],
        out_specs=pl.BlockSpec((TB, NUM_ACTIONS), lambda i: (i, 0)),     # thin output
        compiler_params=pltpu.CompilerParams(
            dimension_semantics=("parallel",)),
        cost_estimate=pl.CostEstimate(
            flops=flops, transcendentals=0, bytes_accessed=bytes_accessed),
    )(x, w_packed, b_packed)

    return out[:B]


def init_params(key):
    """Mirror the module init: W ~ N(0, 0.1) (stored as (in, out));
       biases: PyTorch Linear default U(-1/sqrt(fan_in), 1/sqrt(fan_in))."""
    params = []
    for i in range(NUM_LAYERS):
        fan_in, fan_out = LAYER_SIZES[i], LAYER_SIZES[i + 1]
        key, kw, kb = jax.random.split(key, 3)
        w = 0.1 * jax.random.normal(kw, (fan_in, fan_out), dtype=jnp.float32)
        bound = 1.0 / jnp.sqrt(jnp.float32(fan_in))
        b = jax.random.uniform(kb, (1, fan_out), dtype=jnp.float32,
                               minval=-bound, maxval=bound)
        params.append((w, b))
    return params


def reference_forward_f32(x, params):
    """Pure f32 reference (module semantics)."""
    h = x
    for i, (w, b) in enumerate(params):
        h = h @ w + b
        if i < len(params) - 1:
            h = jnp.maximum(h, 0.0)
    return h


def reference_forward_bf16(x, params):
    """Reference that emulates the kernel's numerics: bf16-rounded weights,
       fc1 in f32 on the VPU, fc2..out with bf16 inputs / f32 accumulate."""
    w0, b0 = params[0]
    h = jnp.maximum(x @ w0.astype(jnp.bfloat16).astype(jnp.float32) + b0, 0.0)
    for i in range(1, NUM_LAYERS):
        w, b = params[i]
        h = jnp.dot(h.astype(jnp.bfloat16), w.astype(jnp.bfloat16),
                    preferred_element_type=jnp.float32) + b
        if i < NUM_LAYERS - 1:
            h = jnp.maximum(h, 0.0)
    return h


if __name__ == "__main__":
    key = jax.random.PRNGKey(0)
    params = init_params(key)
    w_packed, b_packed = pack_params(params)

    def check(batch, kx):
        x = jax.random.normal(kx, (batch, NUM_STATES), dtype=jnp.float32)
        out = jax.block_until_ready(net_forward(x, w_packed, b_packed))
        assert out.shape == (batch, NUM_ACTIONS)
        ref_bf16 = reference_forward_bf16(x, params)
        ref_f32 = reference_forward_f32(x, params)
        # Tight check vs the bf16-emulating reference (same numerics as kernel).
        assert jnp.allclose(out, ref_bf16, atol=1e-3, rtol=1e-3), \
            f"bf16 mismatch at B={batch}"
        # Loose semantic sanity check vs the pure-f32 module forward.
        assert jnp.allclose(out, ref_f32, atol=1e-1, rtol=1e-1), \
            f"f32 semantic mismatch at B={batch}"

    key, k1, k2, k3 = jax.random.split(key, 4)
    check(8, k1)      # small batch: single 8-row tile, grid=(1,)
    check(300, k2)    # ragged batch: TB=256, grid=(2,), padded tail sliced off
    check(2500, k3)   # larger batch: TB=1280, grid=(2,), exercises big-tile path

    print("KERNEL_OK")
</pallas_src>

<mosaic_0001>
module attributes {stable_mosaic.version = 11 : i64} {
  func.func @_mlp_kernel(%arg0: i32, %arg1: memref<8x2xf32, #tpu.memory_space<vmem>>, %arg2: memref<5x128x128xbf16, #tpu.memory_space<vmem>>, %arg3: memref<5x128xf32, #tpu.memory_space<vmem>>, %arg4: memref<8x8xf32, #tpu.memory_space<vmem>>) attributes {dimension_semantics = [#tpu.dimension_semantics<parallel>], iteration_bounds = array<i64: 1>, scalar_prefetch = 0 : i64, scratch_operands = 0 : i64, tpu.core_type = #tpu.core_type<tc>, window_params = [{transform_indices = @transform_0, window_bounds = array<i64: 8, 2>}, {pipeline_mode = #tpu.pipeline_mode<synchronous>, transform_indices = @transform_1, window_bounds = array<i64: 5, 128, 128>}, {pipeline_mode = #tpu.pipeline_mode<synchronous>, transform_indices = @transform_2, window_bounds = array<i64: 5, 128>}, {transform_indices = @transform_3, window_bounds = array<i64: 8, 8>}]} {
    %c0 = arith.constant 0 : index
    %c0_0 = arith.constant 0 : index
    %0 = vector.load %arg1[%c0, %c0_0] : memref<8x2xf32, #tpu.memory_space<vmem>>, vector<8x2xf32>
    %c0_1 = arith.constant 0 : index
    %c0_2 = arith.constant 0 : index
    %c0_3 = arith.constant 0 : index
    %1 = vector.load %arg2[%c0_1, %c0_2, %c0_3] : memref<5x128x128xbf16, #tpu.memory_space<vmem>>, vector<1x128x128xbf16>
    %2 = vector.shape_cast %1 : vector<1x128x128xbf16> to vector<128x128xbf16>
    %3 = arith.extf %2 : vector<128x128xbf16> to vector<128x128xf32>
    %4 = vector.extract_strided_slice %0 {offsets = [0, 0], sizes = [8, 1], strides = [1, 1]} : vector<8x2xf32> to vector<8x1xf32>
    %5 = vector.extract_strided_slice %3 {offsets = [0, 0], sizes = [1, 128], strides = [1, 1]} : vector<128x128xf32> to vector<1x128xf32>
    %6 = vector.broadcast %4 : vector<8x1xf32> to vector<8x128xf32>
    %7 = vector.broadcast %5 : vector<1x128xf32> to vector<8x128xf32>
    %8 = arith.mulf %6, %7 : vector<8x128xf32>
    %9 = vector.extract_strided_slice %0 {offsets = [0, 1], sizes = [8, 1], strides = [1, 1]} : vector<8x2xf32> to vector<8x1xf32>
    %10 = vector.extract_strided_slice %3 {offsets = [1, 0], sizes = [1, 128], strides = [1, 1]} : vector<128x128xf32> to vector<1x128xf32>
    %11 = vector.broadcast %9 : vector<8x1xf32> to vector<8x128xf32>
    %12 = vector.broadcast %10 : vector<1x128xf32> to vector<8x128xf32>
    %13 = arith.mulf %11, %12 : vector<8x128xf32>
    %14 = arith.addf %8, %13 : vector<8x128xf32>
    %c0_4 = arith.constant 0 : index
    %c0_5 = arith.constant 0 : index
    %15 = vector.load %arg3[%c0_4, %c0_5] : memref<5x128xf32, #tpu.memory_space<vmem>>, vector<1x128xf32>
    %16 = vector.broadcast %15 : vector<1x128xf32> to vector<8x128xf32>
    %17 = arith.addf %14, %16 : vector<8x128xf32>
    %cst = arith.constant 0.000000e+00 : f32
    %18 = vector.broadcast %cst : f32 to vector<8x128xf32>
    %19 = arith.maximumf %17, %18 : vector<8x128xf32>
    %20 = arith.truncf %19 : vector<8x128xf32> to vector<8x128xbf16>
    %c1 = arith.constant 1 : index
    %c0_6 = arith.constant 0 : index
    %c0_7 = arith.constant 0 : index
    %21 = vector.load %arg2[%c1, %c0_6, %c0_7] : memref<5x128x128xbf16, #tpu.memory_space<vmem>>, vector<1x128x128xbf16>
    %22 = vector.shape_cast %21 : vector<1x128x128xbf16> to vector<128x128xbf16>
    %cst_8 = arith.constant dense<0.000000e+00> : vector<8x128xf32>
    %23 = tpu.matmul %20, %22, %cst_8 {dimension_numbers = #tpu.dot_dimension_numbers<[1], [0], [0], [1], [0, 0, 1, 1], [], []>} : vector<8x128xbf16>, vector<128x128xbf16>, vector<8x128xf32> -> vector<8x128xf32>
    %c1_9 = arith.constant 1 : index
    %c0_10 = arith.constant 0 : index
    %24 = vector.load %arg3[%c1_9, %c0_10] : memref<5x128xf32, #tpu.memory_space<vmem>>, vector<1x128xf32>
    %25 = vector.broadcast %24 : vector<1x128xf32> to vector<8x128xf32>
    %26 = arith.addf %23, %25 : vector<8x128xf32>
    %cst_11 = arith.constant 0.000000e+00 : f32
    %27 = vector.broadcast %cst_11 : f32 to vector<8x128xf32>
    %28 = arith.maximumf %26, %27 : vector<8x128xf32>
    %29 = arith.truncf %28 : vector<8x128xf32> to vector<8x128xbf16>
    %c2 = arith.constant 2 : index
    %c0_12 = arith.constant 0 : index
    %c0_13 = arith.constant 0 : index
    %30 = vector.load %arg2[%c2, %c0_12, %c0_13] : memref<5x128x128xbf16, #tpu.memory_space<vmem>>, vector<1x128x128xbf16>
    %31 = vector.shape_cast %30 : vector<1x128x128xbf16> to vector<128x128xbf16>
    %cst_14 = arith.constant dense<0.000000e+00> : vector<8x128xf32>
    %32 = tpu.matmul %29, %31, %cst_14 {dimension_numbers = #tpu.dot_dimension_numbers<[1], [0], [0], [1], [0, 0, 1, 1], [], []>} : vector<8x128xbf16>, vector<128x128xbf16>, vector<8x128xf32> -> vector<8x128xf32>
    %c2_15 = arith.constant 2 : index
    %c0_16 = arith.constant 0 : index
    %33 = vector.load %arg3[%c2_15, %c0_16] : memref<5x128xf32, #tpu.memory_space<vmem>>, vector<1x128xf32>
    %34 = vector.broadcast %33 : vector<1x128xf32> to vector<8x128xf32>
    %35 = arith.addf %32, %34 : vector<8x128xf32>
    %cst_17 = arith.constant 0.000000e+00 : f32
    %36 = vector.broadcast %cst_17 : f32 to vector<8x128xf32>
    %37 = arith.maximumf %35, %36 : vector<8x128xf32>
    %38 = arith.truncf %37 : vector<8x128xf32> to vector<8x128xbf16>
    %c3 = arith.constant 3 : index
    %c0_18 = arith.constant 0 : index
    %c0_19 = arith.constant 0 : index
    %39 = vector.load %arg2[%c3, %c0_18, %c0_19] : memref<5x128x128xbf16, #tpu.memory_space<vmem>>, vector<1x128x128xbf16>
    %40 = vector.shape_cast %39 : vector<1x128x128xbf16> to vector<128x128xbf16>
    %cst_20 = arith.constant dense<0.000000e+00> : vector<8x128xf32>
    %41 = tpu.matmul %38, %40, %cst_20 {dimension_numbers = #tpu.dot_dimension_numbers<[1], [0], [0], [1], [0, 0, 1, 1], [], []>} : vector<8x128xbf16>, vector<128x128xbf16>, vector<8x128xf32> -> vector<8x128xf32>
    %c3_21 = arith.constant 3 : index
    %c0_22 = arith.constant 0 : index
    %42 = vector.load %arg3[%c3_21, %c0_22] : memref<5x128xf32, #tpu.memory_space<vmem>>, vector<1x128xf32>
    %43 = vector.broadcast %42 : vector<1x128xf32> to vector<8x128xf32>
    %44 = arith.addf %41, %43 : vector<8x128xf32>
    %cst_23 = arith.constant 0.000000e+00 : f32
    %45 = vector.broadcast %cst_23 : f32 to vector<8x128xf32>
    %46 = arith.maximumf %44, %45 : vector<8x128xf32>
    %47 = arith.truncf %46 : vector<8x128xf32> to vector<8x128xbf16>
    %c4 = arith.constant 4 : index
    %c0_24 = arith.constant 0 : index
    %c0_25 = arith.constant 0 : index
    %48 = vector.load %arg2[%c4, %c0_24, %c0_25] : memref<5x128x128xbf16, #tpu.memory_space<vmem>>, vector<1x128x128xbf16>
    %49 = vector.shape_cast %48 : vector<1x128x128xbf16> to vector<128x128xbf16>
    %cst_26 = arith.constant dense<0.000000e+00> : vector<8x128xf32>
    %50 = tpu.matmul %47, %49, %cst_26 {dimension_numbers = #tpu.dot_dimension_numbers<[1], [0], [0], [1], [0, 0, 1, 1], [], []>} : vector<8x128xbf16>, vector<128x128xbf16>, vector<8x128xf32> -> vector<8x128xf32>
    %c4_27 = arith.constant 4 : index
    %c0_28 = arith.constant 0 : index
    %51 = vector.load %arg3[%c4_27, %c0_28] : memref<5x128xf32, #tpu.memory_space<vmem>>, vector<1x128xf32>
    %52 = vector.broadcast %51 : vector<1x128xf32> to vector<8x128xf32>
    %53 = arith.addf %50, %52 : vector<8x128xf32>
    %54 = vector.extract_strided_slice %53 {offsets = [0, 0], sizes = [8, 8], strides = [1, 1]} : vector<8x128xf32> to vector<8x8xf32>
    %c0_29 = arith.constant 0 : index
    %c0_30 = arith.constant 0 : index
    %55 = vector.load %arg4[%c0_29, %c0_30] : memref<8x8xf32, #tpu.memory_space<vmem>>, vector<8x8xf32>
    tpu.vector_store %arg4[%c0_29, %c0_30], %54 {strides = array<i32>} : memref<8x8xf32, #tpu.memory_space<vmem>>, vector<8x8xf32>,
    return
  }
  func.func @transform_0(%arg0: i32) -> (i32, i32) {
    %c0_i32 = arith.constant 0 : i32
    %c0_i32_0 = arith.constant 0 : i32
    return %arg0, %c0_i32 : i32, i32
  }
  func.func @transform_1(%arg0: i32) -> (i32, i32, i32) {
    %c0_i32 = arith.constant 0 : i32
    %c0_i32_0 = arith.constant 0 : i32
    %c0_i32_1 = arith.constant 0 : i32
    %c0_i32_2 = arith.constant 0 : i32
    return %c0_i32, %c0_i32_0, %c0_i32_1 : i32, i32, i32
  }
  func.func @transform_2(%arg0: i32) -> (i32, i32) {
    %c0_i32 = arith.constant 0 : i32
    %c0_i32_0 = arith.constant 0 : i32
    %c0_i32_1 = arith.constant 0 : i32
    return %c0_i32, %c0_i32_0 : i32, i32
  }
  func.func @transform_3(%arg0: i32) -> (i32, i32) {
    %c0_i32 = arith.constant 0 : i32
    %c0_i32_0 = arith.constant 0 : i32
    return %arg0, %c0_i32 : i32, i32
  }
}

</mosaic_0001>

<llo_original>
// kernel: tpu_custom_call.1
$region0: #{tpu_custom_call.1}
  #allocation0 [shape = 'u32[]', space=smem, size = 0x4, offset = 0x4, fixed_abs, tag = 'smem constant byte address 0x4 - core index']
  #allocation1 [shape = 'u32[144,128]{1,0:T(1,128)}', space=vmem, size = 0x12000, scoped, tag = 'internal scratch']
  %s0 = inlined_call_operand.vmem [shape: f32[8,2], index: 0, kind: input, shape index: {}]
  %s1 = inlined_call_operand.hbm [shape: bf16[5,128,128], index: 1, kind: input, shape index: {}]
  %s2 = inlined_call_operand.vmem [shape: f32[5,128], index: 2, kind: input, shape index: {}]
  %s3 = inlined_call_operand.hbm [shape: f32[8,8], index: 3, kind: output, shape index: {}]
  %s4 = sld [smem:[#allocation0]]
  $region26: #{tpu_custom_call.1} parent=0
    _
  %s6 = ssub.s32 1, %s4
  %s7 = scalar_select 0, %s6, %s4
  $region1: #{tpu_custom_call.1} parent=0
    #allocation2 [shape = 'u8[163840]{0}', space=vmem, size = 0x28000, scoped, tag = 'input window, operand 1, single buffered']
    #allocation3 [shape = 's32[1]{0}', space=sflag, size = 0x4, scoped, tag = 'scoped memory for tpu_custom_call.1']
    #allocation4 [shape = 's32[1]{0}', space=sflag, size = 0x4, scoped, tag = 'scoped memory for tpu_custom_call.1']
    #allocation5 [shape = 'u8[4096]{0}', space=vmem, size = 0x1000, scoped, tag = 'output window, operand 0, single buffered']
    %8 = vsyncpa [#allocation3], 0
    %9 = vsyncpa [#allocation4], 0
    // Predicated region
    $region2: #{tpu_custom_call.1} parent=1 // pred_check
      _
    $region3: #{tpu_custom_call.1} parent=1 // pred_check_branch
      %11 = sbr.rel (0) target = $region5
    $region4: #{tpu_custom_call.1} parent=1 // pred_region
      _
    $region5: #{tpu_custom_call.1} parent=1 // pred_fallthru
      _
    // Predicated region
    $region6: #{tpu_custom_call.1} parent=1 // pred_check
      _
    $region7: #{tpu_custom_call.1} parent=1 // pred_check_branch
      %13 = sbr.rel (0) target = $region9
    $region8: #{tpu_custom_call.1} parent=1 // pred_region
      %s15 = ssub.s32 5120, 5120
      %16 = vsyncadd [#allocation3], %s15
      %s17 = sshll.u32 [#allocation2], 4
      %s18 = int_to_ptr.vmem [resolvable:$true] %s17
      %23 = dma.hbm_to_vmem [thread:$0]  %s1, 5120, %s18, [#allocation3], 64, 64, 4
    $region9: #{tpu_custom_call.1} parent=1 // pred_fallthru
      _
    // Predicated region
    $region10: #{tpu_custom_call.1} parent=1 // pred_check
      _
    $region11: #{tpu_custom_call.1} parent=1 // pred_check_branch
      %25 = sbr.rel (0) target = $region13
    $region12: #{tpu_custom_call.1} parent=1 // pred_region
      _
    $region13: #{tpu_custom_call.1} parent=1 // pred_fallthru
      _
    // Predicated region
    $region14: #{tpu_custom_call.1} parent=1 // pred_check
      _
    $region15: #{tpu_custom_call.1} parent=1 // pred_check_branch
      %27 = sbr.rel (0) target = $region17
    $region16: #{tpu_custom_call.1} parent=1 // pred_region
      %28 = dma.done [#allocation3], 5120
    $region17: #{tpu_custom_call.1} parent=1 // pred_fallthru
      _
    %v30 = vld [vmem:[%s0] sm:$0xff]
    %v31 = vld [vmem:[#allocation2] sm:$0xf]
    %v32 = vunpack.c.l.bf16 %v31
    %34 = vset.pattern.permute.xlu0 0
    %35 = vperm.xlu0 %34, %v30
    %v36 = vpop.permute.xlu0 %35
    %v38 = vlaneseq
    %v39 = vshrl.u32 %v38, 7
    %v40 = vsub.s32 0, %v39
    %v41 = vrot.slane %v32, %v40
    %v42 = vmul.f32 %v36, %v41
    %43 = vset.pattern.permute.xlu0 1
    %44 = vperm.xlu0 %43, %v30
    %v45 = vpop.permute.xlu0 %44
    %v47 = vlaneseq
    %v48 = vshrl.u32 %v47, 7
    %v49 = vsub.s32 1, %v48
    %v50 = vrot.slane %v32, %v49
    %v51 = vmul.f32 %v45, %v50
    %v52 = vadd.f32 %v42, %v51
    %v53 = vld [vmem:[%s2] sm:$0x1]
    %v54 = vlaneseq
    %v55 = vshrl.u32 %v54, 7
    %v56 = vsub.s32 0, %v55
    %v57 = vrot.slane %v53, %v56
    %v58 = vadd.f32 %v52, %v57
    %v59 = vmax.f32 %v58, 0.0
    %v60 = vpack.c.bf16 %v59, %v59
    %s61 = scalar_lea.vmem [#allocation2], 64
    %v62 = vld [vmem:[%s61] sm:$0xf]
    %v63 = vld [vmem:[%s61 + $0x4] sm:$0xf]
    %v64 = vld [vmem:[%s61 + $0x8] sm:$0xf]
    %v65 = vld [vmem:[%s61 + $0xc] sm:$0xf]
    %v66 = vld [vmem:[%s61 + $0x10] sm:$0xf]
    %v67 = vld [vmem:[%s61 + $0x14] sm:$0xf]
    %v68 = vld [vmem:[%s61 + $0x18] sm:$0xf]
    %v69 = vld [vmem:[%s61 + $0x1c] sm:$0xf]
    %v70 = vld [vmem:[%s61 + $0x20] sm:$0xf]
    %v71 = vld [vmem:[%s61 + $0x24] sm:$0xf]
    %v72 = vld [vmem:[%s61 + $0x28] sm:$0xf]
    %v73 = vld [vmem:[%s61 + $0x2c] sm:$0xf]
    %v74 = vld [vmem:[%s61 + $0x30] sm:$0xf]
    %v75 = vld [vmem:[%s61 + $0x34] sm:$0xf]
    %v76 = vld [vmem:[%s61 + $0x38] sm:$0xf]
    %v77 = vld [vmem:[%s61 + $0x3c] sm:$0xf]
    %v78 = vld [vmem:[%s2 + $0x1] sm:$0x1]
    %v79 = vlaneseq
    %v80 = vshrl.u32 %v79, 7
    %v81 = vsub.s32 0, %v80
    %v82 = vrot.slane %v78, %v81
    %v99 = vunpack.c.l.b16 %v62
    %v100 = vunpack.c.l.b16 %v63
    %v101 = vunpack.c.l.b16 %v64
    %v102 = vunpack.c.l.b16 %v65
    %v103 = vunpack.c.l.b16 %v66
    %v104 = vunpack.c.l.b16 %v67
    %v105 = vunpack.c.l.b16 %v68
    %v106 = vunpack.c.l.b16 %v69
    %v107 = vunpack.c.l.b16 %v70
    %v108 = vunpack.c.l.b16 %v71
    %v109 = vunpack.c.l.b16 %v72
    %v110 = vunpack.c.l.b16 %v73
    %v111 = vunpack.c.l.b16 %v74
    %v112 = vunpack.c.l.b16 %v75
    %v113 = vunpack.c.l.b16 %v76
    %v114 = vunpack.c.l.b16 %v77
    %v115 = vpack.c.b16 %v100, %v99
    %v116 = vpack.c.b16 %v102, %v101
    %v117 = vpack.c.b16 %v104, %v103
    %v118 = vpack.c.b16 %v106, %v105
    %v119 = vpack.c.b16 %v108, %v107
    %v120 = vpack.c.b16 %v110, %v109
    %v121 = vpack.c.b16 %v112, %v111
    %v122 = vpack.c.b16 %v114, %v113
    %131 = vmatprep.subr.bf16.mxu0 0
    %132 = vmatpush1.bf16.msra.mxu0 %v122
    %133 = vmatprep.subr.bf16.mxu0 0
    %134 = vmatpush1.bf16.msra.mxu0 %v121
    %135 = vmatprep.subr.bf16.mxu0 0
    %136 = vmatpush1.bf16.msra.mxu0 %v120
    %137 = vmatprep.subr.bf16.mxu0 0
    %138 = vmatpush1.bf16.msra.mxu0 %v119
    %139 = vmatprep.subr.bf16.mxu0 0
    %140 = vmatpush1.bf16.msra.mxu0 %v118
    %141 = vmatprep.subr.bf16.mxu0 0
    %142 = vmatpush1.bf16.msra.mxu0 %v117
    %143 = vmatprep.subr.bf16.mxu0 0
    %144 = vmatpush1.bf16.msra.mxu0 %v116
    %145 = vmatprep.subr.bf16.mxu0 0
    %146 = vmatpush1.bf16.msra.mxu0 %v115
    %147 = vmatprep.subr.bf16.mxu0 0
    %148 = vmatpush2.bf16.msra.mxu0 0
    %149 = vmatprep.subr.bf16.mxu0 0
    %150 = vmatpush2.bf16.msra.mxu0 0
    %151 = vmatprep.subr.bf16.mxu0 0
    %152 = vmatpush2.bf16.msra.mxu0 0
    %153 = vmatprep.subr.bf16.mxu0 0
    %154 = vmatpush2.bf16.msra.mxu0 0
    %155 = vmatprep.subr.bf16.mxu0 0
    %156 = vmatpush2.bf16.msra.mxu0 0
    %157 = vmatprep.subr.bf16.mxu0 0
    %158 = vmatpush2.bf16.msra.mxu0 0
    %159 = vmatprep.subr.bf16.mxu0 0
    %160 = vmatpush2.bf16.msra.mxu0 0
    %161 = vmatprep.subr.bf16.mxu0 0
    %162 = vmatpush2.bf16.msra.mxu0 0
    %163 = vmatprep.mubr.bf16.mxu0 0
    %164 = vmatmul.mubr.bf16.gmra.mxu0 %v60
    %v165 = vpop.f32.mrf.mxu0
    %v166 = vadd.f32 %v82, %v165
    %v167 = vpop.f32.mrf.mxu0
    %v168 = vpop.f32.mrf.mxu0
    %v169 = vpop.f32.mrf.mxu0
    %170 = vdwg.mxu0
    %v171 = vmax.f32 %v166, 0.0
    %v172 = vpack.c.bf16 %v171, %v171
    %s173 = scalar_lea.vmem [#allocation2], 128
    %v174 = vld [vmem:[%s173] sm:$0xf]
    %v175 = vld [vmem:[%s173 + $0x4] sm:$0xf]
    %v176 = vld [vmem:[%s173 + $0x8] sm:$0xf]
    %v177 = vld [vmem:[%s173 + $0xc] sm:$0xf]
    %v178 = vld [vmem:[%s173 + $0x10] sm:$0xf]
    %v179 = vld [vmem:[%s173 + $0x14] sm:$0xf]
    %v180 = vld [vmem:[%s173 + $0x18] sm:$0xf]
    %v181 = vld [vmem:[%s173 + $0x1c] sm:$0xf]
    %v182 = vld [vmem:[%s173 + $0x20] sm:$0xf]
    %v183 = vld [vmem:[%s173 + $0x24] sm:$0xf]
    %v184 = vld [vmem:[%s173 + $0x28] sm:$0xf]
    %v185 = vld [vmem:[%s173 + $0x2c] sm:$0xf]
    %v186 = vld [vmem:[%s173 + $0x30] sm:$0xf]
    %v187 = vld [vmem:[%s173 + $0x34] sm:$0xf]
    %v188 = vld [vmem:[%s173 + $0x38] sm:$0xf]
    %v189 = vld [vmem:[%s173 + $0x3c] sm:$0xf]
    %v190 = vld [vmem:[%s2 + $0x2] sm:$0x1]
    %v191 = vlaneseq
    %v192 = vshrl.u32 %v191, 7
    %v193 = vsub.s32 0, %v192
    %v194 = vrot.slane %v190, %v193
    %v211 = vunpack.c.l.b16 %v174
    %v212 = vunpack.c.l.b16 %v175
    %v213 = vunpack.c.l.b16 %v176
    %v214 = vunpack.c.l.b16 %v177
    %v215 = vunpack.c.l.b16 %v178
    %v216 = vunpack.c.l.b16 %v179
    %v217 = vunpack.c.l.b16 %v180
    %v218 = vunpack.c.l.b16 %v181
    %v219 = vunpack.c.l.b16 %v182
    %v220 = vunpack.c.l.b16 %v183
    %v221 = vunpack.c.l.b16 %v184
    %v222 = vunpack.c.l.b16 %v185
    %v223 = vunpack.c.l.b16 %v186
    %v224 = vunpack.c.l.b16 %v187
    %v225 = vunpack.c.l.b16 %v188
    %v226 = vunpack.c.l.b16 %v189
    %v227 = vpack.c.b16 %v212, %v211
    %v228 = vpack.c.b16 %v214, %v213
    %v229 = vpack.c.b16 %v216, %v215
    %v230 = vpack.c.b16 %v218, %v217
    %v231 = vpack.c.b16 %v220, %v219
    %v232 = vpack.c.b16 %v222, %v221
    %v233 = vpack.c.b16 %v224, %v223
    %v234 = vpack.c.b16 %v226, %v225
    %243 = vmatprep.subr.bf16.mxu0 0
    %244 = vmatpush1.bf16.msra.mxu0 %v234
    %245 = vmatprep.subr.bf16.mxu0 0
    %246 = vmatpush1.bf16.msra.mxu0 %v233
    %247 = vmatprep.subr.bf16.mxu0 0
    %248 = vmatpush1.bf16.msra.mxu0 %v232
    %249 = vmatprep.subr.bf16.mxu0 0
    %250 = vmatpush1.bf16.msra.mxu0 %v231
    %251 = vmatprep.subr.bf16.mxu0 0
    %252 = vmatpush1.bf16.msra.mxu0 %v230
    %253 = vmatprep.subr.bf16.mxu0 0
    %254 = vmatpush1.bf16.msra.mxu0 %v229
    %255 = vmatprep.subr.bf16.mxu0 0
    %256 = vmatpush1.bf16.msra.mxu0 %v228
    %257 = vmatprep.subr.bf16.mxu0 0
    %258 = vmatpush1.bf16.msra.mxu0 %v227
    %259 = vmatprep.subr.bf16.mxu0 0
    %260 = vmatpush2.bf16.msra.mxu0 0
    %261 = vmatprep.subr.bf16.mxu0 0
    %262 = vmatpush2.bf16.msra.mxu0 0
    %263 = vmatprep.subr.bf16.mxu0 0
    %264 = vmatpush2.bf16.msra.mxu0 0
    %265 = vmatprep.subr.bf16.mxu0 0
    %266 = vmatpush2.bf16.msra.mxu0 0
    %267 = vmatprep.subr.bf16.mxu0 0
    %268 = vmatpush2.bf16.msra.mxu0 0
    %269 = vmatprep.subr.bf16.mxu0 0
    %270 = vmatpush2.bf16.msra.mxu0 0
    %271 = vmatprep.subr.bf16.mxu0 0
    %272 = vmatpush2.bf16.msra.mxu0 0
    %273 = vmatprep.subr.bf16.mxu0 0
    %274 = vmatpush2.bf16.msra.mxu0 0
    %275 = vmatprep.mubr.bf16.mxu0 0
    %276 = vmatmul.mubr.bf16.gmra.mxu0 %v172
    %v277 = vpop.f32.mrf.mxu0
    %v278 = vadd.f32 %v194, %v277
    %v279 = vpop.f32.mrf.mxu0
    %v280 = vpop.f32.mrf.mxu0
    %v281 = vpop.f32.mrf.mxu0
    %282 = vdwg.mxu0
    %v283 = vmax.f32 %v278, 0.0
    %v284 = vpack.c.bf16 %v283, %v283
    %s285 = scalar_lea.vmem [#allocation2], 192
    %v286 = vld [vmem:[%s285] sm:$0xf]
    %v287 = vld [vmem:[%s285 + $0x4] sm:$0xf]
    %v288 = vld [vmem:[%s285 + $0x8] sm:$0xf]
    %v289 = vld [vmem:[%s285 + $0xc] sm:$0xf]
    %v290 = vld [vmem:[%s285 + $0x10] sm:$0xf]
    %v291 = vld [vmem:[%s285 + $0x14] sm:$0xf]
    %v292 = vld [vmem:[%s285 + $0x18] sm:$0xf]
    %v293 = vld [vmem:[%s285 + $0x1c] sm:$0xf]
    %v294 = vld [vmem:[%s285 + $0x20] sm:$0xf]
    %v295 = vld [vmem:[%s285 + $0x24] sm:$0xf]
    %v296 = vld [vmem:[%s285 + $0x28] sm:$0xf]
    %v297 = vld [vmem:[%s285 + $0x2c] sm:$0xf]
    %v298 = vld [vmem:[%s285 + $0x30] sm:$0xf]
    %v299 = vld [vmem:[%s285 + $0x34] sm:$0xf]
    %v300 = vld [vmem:[%s285 + $0x38] sm:$0xf]
    %v301 = vld [vmem:[%s285 + $0x3c] sm:$0xf]
    %v302 = vld [vmem:[%s2 + $0x3] sm:$0x1]
    %v303 = vlaneseq
    %v304 = vshrl.u32 %v303, 7
    %v305 = vsub.s32 0, %v304
    %v306 = vrot.slane %v302, %v305
    %v323 = vunpack.c.l.b16 %v286
    %v324 = vunpack.c.l.b16 %v287
    %v325 = vunpack.c.l.b16 %v288
    %v326 = vunpack.c.l.b16 %v289
    %v327 = vunpack.c.l.b16 %v290
    %v328 = vunpack.c.l.b16 %v291
    %v329 = vunpack.c.l.b16 %v292
    %v330 = vunpack.c.l.b16 %v293
    %v331 = vunpack.c.l.b16 %v294
    %v332 = vunpack.c.l.b16 %v295
    %v333 = vunpack.c.l.b16 %v296
    %v334 = vunpack.c.l.b16 %v297
    %v335 = vunpack.c.l.b16 %v298
    %v336 = vunpack.c.l.b16 %v299
    %v337 = vunpack.c.l.b16 %v300
    %v338 = vunpack.c.l.b16 %v301
    %v339 = vpack.c.b16 %v324, %v323
    %v340 = vpack.c.b16 %v326, %v325
    %v341 = vpack.c.b16 %v328, %v327
    %v342 = vpack.c.b16 %v330, %v329
    %v343 = vpack.c.b16 %v332, %v331
    %v344 = vpack.c.b16 %v334, %v333
    %v345 = vpack.c.b16 %v336, %v335
    %v346 = vpack.c.b16 %v338, %v337
    %355 = vmatprep.subr.bf16.mxu0 0
    %356 = vmatpush1.bf16.msra.mxu0 %v346
    %357 = vmatprep.subr.bf16.mxu0 0
    %358 = vmatpush1.bf16.msra.mxu0 %v345
    %359 = vmatprep.subr.bf16.mxu0 0
    %360 = vmatpush1.bf16.msra.mxu0 %v344
    %361 = vmatprep.subr.bf16.mxu0 0
    %362 = vmatpush1.bf16.msra.mxu0 %v343
    %363 = vmatprep.subr.bf16.mxu0 0
    %364 = vmatpush1.bf16.msra.mxu0 %v342
    %365 = vmatprep.subr.bf16.mxu0 0
    %366 = vmatpush1.bf16.msra.mxu0 %v341
    %367 = vmatprep.subr.bf16.mxu0 0
    %368 = vmatpush1.bf16.msra.mxu0 %v340
    %369 = vmatprep.subr.bf16.mxu0 0
    %370 = vmatpush1.bf16.msra.mxu0 %v339
    %371 = vmatprep.subr.bf16.mxu0 0
    %372 = vmatpush2.bf16.msra.mxu0 0
    %373 = vmatprep.subr.bf16.mxu0 0
    %374 = vmatpush2.bf16.msra.mxu0 0
    %375 = vmatprep.subr.bf16.mxu0 0
    %376 = vmatpush2.bf16.msra.mxu0 0
    %377 = vmatprep.subr.bf16.mxu0 0
    %378 = vmatpush2.bf16.msra.mxu0 0
    %379 = vmatprep.subr.bf16.mxu0 0
    %380 = vmatpush2.bf16.msra.mxu0 0
    %381 = vmatprep.subr.bf16.mxu0 0
    %382 = vmatpush2.bf16.msra.mxu0 0
    %383 = vmatprep.subr.bf16.mxu0 0
    %384 = vmatpush2.bf16.msra.mxu0 0
    %385 = vmatprep.subr.bf16.mxu0 0
    %386 = vmatpush2.bf16.msra.mxu0 0
    %387 = vmatprep.mubr.bf16.mxu0 0
    %388 = vmatmul.mubr.bf16.gmra.mxu0 %v284
    %v389 = vpop.f32.mrf.mxu0
    %v390 = vadd.f32 %v306, %v389
    %v391 = vpop.f32.mrf.mxu0
    %v392 = vpop.f32.mrf.mxu0
    %v393 = vpop.f32.mrf.mxu0
    %394 = vdwg.mxu0
    %v395 = vmax.f32 %v390, 0.0
    %v396 = vpack.c.bf16 %v395, %v395
    %s397 = scalar_lea.vmem [#allocation2], 256
    %v398 = vld [vmem:[%s397] sm:$0xf]
    %v399 = vld [vmem:[%s397 + $0x4] sm:$0xf]
    %v400 = vld [vmem:[%s397 + $0x8] sm:$0xf]
    %v401 = vld [vmem:[%s397 + $0xc] sm:$0xf]
    %v402 = vld [vmem:[%s397 + $0x10] sm:$0xf]
    %v403 = vld [vmem:[%s397 + $0x14] sm:$0xf]
    %v404 = vld [vmem:[%s397 + $0x18] sm:$0xf]
    %v405 = vld [vmem:[%s397 + $0x1c] sm:$0xf]
    %v406 = vld [vmem:[%s397 + $0x20] sm:$0xf]
    %v407 = vld [vmem:[%s397 + $0x24] sm:$0xf]
    %v408 = vld [vmem:[%s397 + $0x28] sm:$0xf]
    %v409 = vld [vmem:[%s397 + $0x2c] sm:$0xf]
    %v410 = vld [vmem:[%s397 + $0x30] sm:$0xf]
    %v411 = vld [vmem:[%s397 + $0x34] sm:$0xf]
    %v412 = vld [vmem:[%s397 + $0x38] sm:$0xf]
    %v413 = vld [vmem:[%s397 + $0x3c] sm:$0xf]
    %v414 = vld [vmem:[%s2 + $0x4] sm:$0x1]
    %v415 = vlaneseq
    %v416 = vshrl.u32 %v415, 7
    %v417 = vsub.s32 0, %v416
    %v418 = vrot.slane %v414, %v417
    %v435 = vunpack.c.l.b16 %v398
    %v436 = vunpack.c.l.b16 %v399
    %v437 = vunpack.c.l.b16 %v400
    %v438 = vunpack.c.l.b16 %v401
    %v439 = vunpack.c.l.b16 %v402
    %v440 = vunpack.c.l.b16 %v403
    %v441 = vunpack.c.l.b16 %v404
    %v442 = vunpack.c.l.b16 %v405
    %v443 = vunpack.c.l.b16 %v406
    %v444 = vunpack.c.l.b16 %v407
    %v445 = vunpack.c.l.b16 %v408
    %v446 = vunpack.c.l.b16 %v409
    %v447 = vunpack.c.l.b16 %v410
    %v448 = vunpack.c.l.b16 %v411
    %v449 = vunpack.c.l.b16 %v412
    %v450 = vunpack.c.l.b16 %v413
    %v451 = vpack.c.b16 %v436, %v435
    %v452 = vpack.c.b16 %v438, %v437
    %v453 = vpack.c.b16 %v440, %v439
    %v454 = vpack.c.b16 %v442, %v441
    %v455 = vpack.c.b16 %v444, %v443
    %v456 = vpack.c.b16 %v446, %v445
    %v457 = vpack.c.b16 %v448, %v447
    %v458 = vpack.c.b16 %v450, %v449
    %467 = vmatprep.subr.bf16.mxu0 0
    %468 = vmatpush1.bf16.msra.mxu0 %v458
    %469 = vmatprep.subr.bf16.mxu0 0
    %470 = vmatpush1.bf16.msra.mxu0 %v457
    %471 = vmatprep.subr.bf16.mxu0 0
    %472 = vmatpush1.bf16.msra.mxu0 %v456
    %473 = vmatprep.subr.bf16.mxu0 0
    %474 = vmatpush1.bf16.msra.mxu0 %v455
    %475 = vmatprep.subr.bf16.mxu0 0
    %476 = vmatpush1.bf16.msra.mxu0 %v454
    %477 = vmatprep.subr.bf16.mxu0 0
    %478 = vmatpush1.bf16.msra.mxu0 %v453
    %479 = vmatprep.subr.bf16.mxu0 0
    %480 = vmatpush1.bf16.msra.mxu0 %v452
    %481 = vmatprep.subr.bf16.mxu0 0
    %482 = vmatpush1.bf16.msra.mxu0 %v451
    %483 = vmatprep.subr.bf16.mxu0 0
    %484 = vmatpush2.bf16.msra.mxu0 0
    %485 = vmatprep.subr.bf16.mxu0 0
    %486 = vmatpush2.bf16.msra.mxu0 0
    %487 = vmatprep.subr.bf16.mxu0 0
    %488 = vmatpush2.bf16.msra.mxu0 0
    %489 = vmatprep.subr.bf16.mxu0 0
    %490 = vmatpush2.bf16.msra.mxu0 0
    %491 = vmatprep.subr.bf16.mxu0 0
    %492 = vmatpush2.bf16.msra.mxu0 0
    %493 = vmatprep.subr.bf16.mxu0 0
    %494 = vmatpush2.bf16.msra.mxu0 0
    %495 = vmatprep.subr.bf16.mxu0 0
    %496 = vmatpush2.bf16.msra.mxu0 0
    %497 = vmatprep.subr.bf16.mxu0 0
    %498 = vmatpush2.bf16.msra.mxu0 0
    %499 = vmatprep.mubr.bf16.mxu0 0
    %500 = vmatmul.mubr.bf16.gmra.mxu0 %v396
    %v501 = vpop.f32.mrf.mxu0
    %v502 = vadd.f32 %v418, %v501
    %v503 = vpop.f32.mrf.mxu0
    %v504 = vpop.f32.mrf.mxu0
    %v505 = vpop.f32.mrf.mxu0
    %506 = vdwg.mxu0
    %vm507 = vcmask 64512
    %508 = vst.msk [vmem:[#allocation5] sm:$0xff] %vm507, %v502
    // Predicated region
    $region18: #{tpu_custom_call.1} parent=1 // pred_check
      _
    $region19: #{tpu_custom_call.1} parent=1 // pred_check_branch
      %510 = sbr.rel (0) target = $region21
    $region20: #{tpu_custom_call.1} parent=1 // pred_region
      %s512 = ssub.s32 128, 128
      %513 = vsyncadd [#allocation4], %s512
      %s515 = sshll.u32 [#allocation5], 4
      %s516 = int_to_ptr.vmem [resolvable:$true] %s515
      %518 = dma.vmem_to_hbm [thread:$0]  %s516, 128, %s3, [#allocation4]
    $region21: #{tpu_custom_call.1} parent=1 // pred_fallthru
      _
    // Predicated region
    $region22: #{tpu_custom_call.1} parent=1 // pred_check
      _
    $region23: #{tpu_custom_call.1} parent=1 // pred_check_branch
      %520 = sbr.rel (0) target = $region25
    $region24: #{tpu_custom_call.1} parent=1 // pred_region
      %521 = dma.done [#allocation4], 128
    $region25: #{tpu_custom_call.1} parent=1 // pred_fallthru
      _
    %522 = vsyncpa [#allocation3], 1
    %523 = vsyncpa [#allocation4], 1

</llo_original>
